<compile_context>
chip_gen: v7x
topology: tpu7x:2x2x1
jax: 0.10.0
libtpu: 0.0.40
codegen_flags: <defaults>
</compile_context>

<pallas_src>
import jax
import jax.numpy as jnp
import numpy as np
from jax.experimental import pallas as pl
from jax.experimental.pallas import tpu as pltpu

# ---------------- configuration (ResBlock(8, 8, 16, level=2, coarsen=True)) ----------------
IN_CHAN, NECK_CHAN, OUT_CHAN = 8, 8, 16
LEVEL, COARSEN = 2, True
MESH_LEVEL = LEVEL - 1 if COARSEN else LEVEL
NV_IN = 10 * 4 ** LEVEL + 2          # 162 vertices at input level
NV_PREV = 10 * 4 ** MESH_LEVEL + 2   # 42  vertices after DownSamp (= conv2 mesh)
NFACE = 20 * 4 ** MESH_LEVEL         # 80  faces of conv2 mesh
N_BATCH = 2
EPS = 1e-5


# ---------------------------------- Pallas kernel ----------------------------------
def resblock_kernel(x_ref, w8_ref, w16_ref, v8_ref, v16_ref, opbd_ref, out_ref):
    # x_ref : (IN_CHAN, N*V)   activations, batch concatenated along lanes, pre-sliced to V=NV_PREV
    # w8_ref: (NECK, IN + 4*NECK) = [w1 | c0 | c1 | c2 | c3]
    # w16_ref: (OUT, 2*NECK)      = [w3 | ws]
    # v8_ref : (NECK, 6)          = [b1 | g1 | be1 | mb | g2 | be2]
    # v16_ref: (OUT, 6)           = [b3 | g3 | be3 | bs | gs | bes]
    # opbd_ref: (N*V, 3*N*V)      = [blkdiag(L^T) | blkdiag(M_ew^T) | blkdiag(M_ns^T)]
    nvb = x_ref.shape[1]                     # N * NV_PREV (static)

    x = x_ref[...]                           # (8, 84)
    w8 = w8_ref[...]
    w16 = w16_ref[...]
    v8 = v8_ref[...]
    v16 = v16_ref[...]

    w1 = w8[:, 0:IN_CHAN]                                   # (8, 8)
    call = w8[:, IN_CHAN:IN_CHAN + 4 * NECK_CHAN]           # (8, 32)  [c0|c1|c2|c3]
    w3 = w16[:, 0:NECK_CHAN]                                # (16, 8)
    ws = w16[:, NECK_CHAN:2 * NECK_CHAN]                    # (16, 8)
    b1, g1, be1, mb, g2, be2 = [v8[:, i:i + 1] for i in range(6)]     # (8, 1) each
    b3, g3, be3, bs, gs, bes = [v16[:, i:i + 1] for i in range(6)]    # (16, 1) each

    inv_cnt = 1.0 / float(nvb)

    def mm(a, b):  # MXU matmul, f32 accumulate
        return jnp.dot(a, b, preferred_element_type=jnp.float32)

    def bnorm(h, gamma, beta):
        # training-mode BatchNorm1d: stats over (batch, vertices) == lane axis here
        mean = jnp.sum(h, axis=1, keepdims=True) * inv_cnt
        d = h - mean
        var = jnp.sum(d * d, axis=1, keepdims=True) * inv_cnt
        scale = gamma * jax.lax.rsqrt(var + EPS)
        return d * scale + beta

    # -------- seq1: conv1 (input already DownSamp'd) -> bn1 -> relu --------
    h = jnp.maximum(bnorm(mm(w1, x) + b1, g1, be1), 0.0)            # (8, 84)

    # -------- conv2: MeshConv, stride=1 (folded operators) --------
    res = mm(h, opbd_ref[...])                                      # (8, 3*N*V) = [lap|gv_ew|gv_ns]
    stacked = jnp.concatenate(
        [h, res[:, 0:nvb], res[:, nvb:2 * nvb], res[:, 2 * nvb:3 * nvb]], axis=0)   # (32, 84)
    h = mm(call, stacked) + mb                                      # (8, 84)

    # -------- bn2 -> relu -> conv3 -> bn3 --------
    h = jnp.maximum(bnorm(h, g2, be2), 0.0)
    x1 = bnorm(mm(w3, h) + b3, g3, be3)                             # (16, 84)

    # -------- seq2 (skip): conv_ (pre-sliced input) -> bn_ --------
    x2 = bnorm(mm(ws, x) + bs, gs, bes)                             # (16, 84)

    # -------- residual add + relu (single lane-contiguous store) --------
    out_ref[...] = jnp.maximum(x1 + x2, 0.0)


# ---------------------------------- wrapper ----------------------------------
def resblock_forward(x, p):
    n = x.shape[0]
    hi = jax.lax.Precision.HIGHEST

    # DownSamp commutes with 1x1 convs -> slice first, then fold batch into lanes: (C, N*V)
    x_flat = jnp.transpose(x[:, :, :NV_PREV], (1, 0, 2)).reshape(IN_CHAN, n * NV_PREV)

    # Fold EW/NS face weighting and F2V into dense vertex operators (host/XLA side).
    m_ewT = jnp.matmul(p['Gx'].T * p['EW'][0][None, :]
                       + p['Gy'].T * p['EW'][1][None, :]
                       + p['Gz'].T * p['EW'][2][None, :], p['F2V'].T, precision=hi)   # (V, V)
    m_nsT = jnp.matmul(p['Gx'].T * p['NS'][0][None, :]
                       + p['Gy'].T * p['NS'][1][None, :]
                       + p['Gz'].T * p['NS'][2][None, :], p['F2V'].T, precision=hi)   # (V, V)

    # Batch-block-diagonal vertex operator, all three features in one matrix.
    eye_n = jnp.eye(n, dtype=jnp.float32)
    opbd = jnp.concatenate([jnp.kron(eye_n, p['L'].T),
                            jnp.kron(eye_n, m_ewT),
                            jnp.kron(eye_n, m_nsT)], axis=1)        # (N*V, 3*N*V)

    # Pack the many tiny parameters into a handful of arrays (fewer DMA descriptors).
    w8 = jnp.concatenate([p['w1'], p['c0'], p['c1'], p['c2'], p['c3']], axis=1)   # (8, 40)
    w16 = jnp.concatenate([p['w3'], p['ws']], axis=1)                             # (16, 16)
    v8 = jnp.concatenate([p['b1'], p['g1'], p['be1'], p['mb'], p['g2'], p['be2']], axis=1)   # (8, 6)
    v16 = jnp.concatenate([p['b3'], p['g3'], p['be3'], p['bs'], p['gs'], p['bes']], axis=1)  # (16, 6)

    # Whole problem fits easily in VMEM -> single invocation, full-array blocks, no grid.
    out_flat = pl.pallas_call(
        resblock_kernel,
        out_shape=jax.ShapeDtypeStruct((OUT_CHAN, n * NV_PREV), jnp.float32),
        in_specs=[pl.BlockSpec(memory_space=pltpu.MemorySpace.VMEM)] * 6,
        out_specs=pl.BlockSpec(memory_space=pltpu.MemorySpace.VMEM),
    )(x_flat, w8, w16, v8, v16, opbd)

    # (OUT, N*V) -> (N, OUT, V)
    return jnp.transpose(out_flat.reshape(OUT_CHAN, n, NV_PREV), (1, 0, 2))


# ------------------------- deterministic parameter init -------------------------
def init_params(key):
    names_shapes = [
        ('w1', (NECK_CHAN, IN_CHAN)), ('b1', (NECK_CHAN, 1)),
        ('g1', (NECK_CHAN, 1)), ('be1', (NECK_CHAN, 1)),
        ('c0', (NECK_CHAN, NECK_CHAN)), ('c1', (NECK_CHAN, NECK_CHAN)),
        ('c2', (NECK_CHAN, NECK_CHAN)), ('c3', (NECK_CHAN, NECK_CHAN)),
        ('mb', (NECK_CHAN, 1)),
        ('L', (NV_PREV, NV_PREV)), ('Gx', (NFACE, NV_PREV)),
        ('Gy', (NFACE, NV_PREV)), ('Gz', (NFACE, NV_PREV)),
        ('EW', (3, NFACE)), ('NS', (3, NFACE)), ('F2V', (NV_PREV, NFACE)),
        ('g2', (NECK_CHAN, 1)), ('be2', (NECK_CHAN, 1)),
        ('w3', (OUT_CHAN, NECK_CHAN)), ('b3', (OUT_CHAN, 1)),
        ('g3', (OUT_CHAN, 1)), ('be3', (OUT_CHAN, 1)),
        ('ws', (OUT_CHAN, IN_CHAN)), ('bs', (OUT_CHAN, 1)),
        ('gs', (OUT_CHAN, 1)), ('bes', (OUT_CHAN, 1)),
    ]
    keys = jax.random.split(key, len(names_shapes))
    gammas = {'g1', 'g2', 'g3', 'gs'}
    mesh_ops = {'L', 'Gx', 'Gy', 'Gz', 'F2V'}
    p = {}
    for (name, shape), k in zip(names_shapes, keys):
        v = jax.random.normal(k, shape, jnp.float32)
        if name in gammas:
            p[name] = 1.0 + 0.1 * v
        elif name in mesh_ops:
            p[name] = 0.2 * v
        else:
            p[name] = 0.3 * v
    return p


# ------------------------------ pure-JAX reference ------------------------------
def ref_forward(x, p):
    hi = jax.lax.Precision.HIGHEST

    def conv(w, b, h):
        return jnp.einsum('oi,niv->nov', w, h, precision=hi) + b[None, :, :]

    def bn(h, g, be):
        m = jnp.mean(h, axis=(0, 2), keepdims=True)
        v = jnp.mean((h - m) ** 2, axis=(0, 2), keepdims=True)
        return (h - m) * jax.lax.rsqrt(v + EPS) * g[None, :, :] + be[None, :, :]

    relu = lambda t: jnp.maximum(t, 0.0)
    h = conv(p['w1'], p['b1'], x)[:, :, :NV_PREV]
    h = relu(bn(h, p['g1'], p['be1']))
    lap = jnp.einsum('uv,ncv->ncu', p['L'], h, precision=hi)
    gx = jnp.einsum('fv,ncv->ncf', p['Gx'], h, precision=hi)
    gy = jnp.einsum('fv,ncv->ncf', p['Gy'], h, precision=hi)
    gz = jnp.einsum('fv,ncv->ncf', p['Gz'], h, precision=hi)
    gf_ew = gx * p['EW'][0][None, None] + gy * p['EW'][1][None, None] + gz * p['EW'][2][None, None]
    gf_ns = gx * p['NS'][0][None, None] + gy * p['NS'][1][None, None] + gz * p['NS'][2][None, None]
    gv_ew = jnp.einsum('vf,ncf->ncv', p['F2V'], gf_ew, precision=hi)
    gv_ns = jnp.einsum('vf,ncf->ncv', p['F2V'], gf_ns, precision=hi)
    h2 = (jnp.einsum('oi,niv->nov', p['c0'], h, precision=hi)
          + jnp.einsum('oi,niv->nov', p['c1'], lap, precision=hi)
          + jnp.einsum('oi,niv->nov', p['c2'], gv_ew, precision=hi)
          + jnp.einsum('oi,niv->nov', p['c3'], gv_ns, precision=hi)
          + p['mb'][None, :, :])
    h2 = relu(bn(h2, p['g2'], p['be2']))
    x1 = bn(conv(p['w3'], p['b3'], h2), p['g3'], p['be3'])
    x2 = bn(conv(p['ws'], p['bs'], x)[:, :, :NV_PREV], p['gs'], p['bes'])
    return relu(x1 + x2)


if __name__ == "__main__":
    key = jax.random.PRNGKey(0)
    kx, kp = jax.random.split(key)
    x = jax.random.normal(kx, (N_BATCH, IN_CHAN, NV_IN), jnp.float32)
    params = init_params(kp)

    out = jax.jit(resblock_forward)(x, params)
    out = jax.block_until_ready(out)

    ref = ref_forward(x, params)
    assert out.shape == (N_BATCH, OUT_CHAN, NV_PREV), out.shape
    np.testing.assert_allclose(np.asarray(out), np.asarray(ref), rtol=2e-2, atol=2e-2)
    print("KERNEL_OK")
</pallas_src>

<mosaic_0001>
module attributes {stable_mosaic.version = 11 : i64} {
  func.func @resblock_kernel(%arg0: memref<8x84xf32, #tpu.memory_space<vmem>>, %arg1: memref<8x40xf32, #tpu.memory_space<vmem>>, %arg2: memref<16x16xf32, #tpu.memory_space<vmem>>, %arg3: memref<8x6xf32, #tpu.memory_space<vmem>>, %arg4: memref<16x6xf32, #tpu.memory_space<vmem>>, %arg5: memref<84x252xf32, #tpu.memory_space<vmem>>, %arg6: memref<16x84xf32, #tpu.memory_space<vmem>>) attributes {dimension_semantics = [], scalar_prefetch = 0 : i64, scratch_operands = 0 : i64, tpu.core_type = #tpu.core_type<tc>} {
    %c0 = arith.constant 0 : index
    %c0_0 = arith.constant 0 : index
    %0 = vector.load %arg0[%c0, %c0_0] : memref<8x84xf32, #tpu.memory_space<vmem>>, vector<8x84xf32>
    %c0_1 = arith.constant 0 : index
    %c0_2 = arith.constant 0 : index
    %1 = vector.load %arg1[%c0_1, %c0_2] : memref<8x40xf32, #tpu.memory_space<vmem>>, vector<8x40xf32>
    %c0_3 = arith.constant 0 : index
    %c0_4 = arith.constant 0 : index
    %2 = vector.load %arg2[%c0_3, %c0_4] : memref<16x16xf32, #tpu.memory_space<vmem>>, vector<16x16xf32>
    %c0_5 = arith.constant 0 : index
    %c0_6 = arith.constant 0 : index
    %3 = vector.load %arg3[%c0_5, %c0_6] : memref<8x6xf32, #tpu.memory_space<vmem>>, vector<8x6xf32>
    %c0_7 = arith.constant 0 : index
    %c0_8 = arith.constant 0 : index
    %4 = vector.load %arg4[%c0_7, %c0_8] : memref<16x6xf32, #tpu.memory_space<vmem>>, vector<16x6xf32>
    %5 = vector.extract_strided_slice %1 {offsets = [0, 0], sizes = [8, 8], strides = [1, 1]} : vector<8x40xf32> to vector<8x8xf32>
    %6 = vector.extract_strided_slice %1 {offsets = [0, 8], sizes = [8, 32], strides = [1, 1]} : vector<8x40xf32> to vector<8x32xf32>
    %7 = vector.extract_strided_slice %2 {offsets = [0, 0], sizes = [16, 8], strides = [1, 1]} : vector<16x16xf32> to vector<16x8xf32>
    %8 = vector.extract_strided_slice %2 {offsets = [0, 8], sizes = [16, 8], strides = [1, 1]} : vector<16x16xf32> to vector<16x8xf32>
    %9 = vector.extract_strided_slice %3 {offsets = [0, 0], sizes = [8, 1], strides = [1, 1]} : vector<8x6xf32> to vector<8x1xf32>
    %10 = vector.extract_strided_slice %3 {offsets = [0, 1], sizes = [8, 1], strides = [1, 1]} : vector<8x6xf32> to vector<8x1xf32>
    %11 = vector.extract_strided_slice %3 {offsets = [0, 2], sizes = [8, 1], strides = [1, 1]} : vector<8x6xf32> to vector<8x1xf32>
    %12 = vector.extract_strided_slice %3 {offsets = [0, 3], sizes = [8, 1], strides = [1, 1]} : vector<8x6xf32> to vector<8x1xf32>
    %13 = vector.extract_strided_slice %3 {offsets = [0, 4], sizes = [8, 1], strides = [1, 1]} : vector<8x6xf32> to vector<8x1xf32>
    %14 = vector.extract_strided_slice %3 {offsets = [0, 5], sizes = [8, 1], strides = [1, 1]} : vector<8x6xf32> to vector<8x1xf32>
    %15 = vector.extract_strided_slice %4 {offsets = [0, 0], sizes = [16, 1], strides = [1, 1]} : vector<16x6xf32> to vector<16x1xf32>
    %16 = vector.extract_strided_slice %4 {offsets = [0, 1], sizes = [16, 1], strides = [1, 1]} : vector<16x6xf32> to vector<16x1xf32>
    %17 = vector.extract_strided_slice %4 {offsets = [0, 2], sizes = [16, 1], strides = [1, 1]} : vector<16x6xf32> to vector<16x1xf32>
    %18 = vector.extract_strided_slice %4 {offsets = [0, 3], sizes = [16, 1], strides = [1, 1]} : vector<16x6xf32> to vector<16x1xf32>
    %19 = vector.extract_strided_slice %4 {offsets = [0, 4], sizes = [16, 1], strides = [1, 1]} : vector<16x6xf32> to vector<16x1xf32>
    %20 = vector.extract_strided_slice %4 {offsets = [0, 5], sizes = [16, 1], strides = [1, 1]} : vector<16x6xf32> to vector<16x1xf32>
    %cst = arith.constant dense<0.000000e+00> : vector<8x84xf32>
    %21 = tpu.matmul %5, %0, %cst {dimension_numbers = #tpu.dot_dimension_numbers<[1], [0], [0], [1], [0, 0, 1, 1], [], []>} : vector<8x8xf32>, vector<8x84xf32>, vector<8x84xf32> -> vector<8x84xf32>
    %22 = vector.broadcast %9 : vector<8x1xf32> to vector<8x84xf32>
    %23 = arith.addf %21, %22 : vector<8x84xf32>
    %cst_9 = arith.constant dense<0.000000e+00> : vector<8xf32>
    %24 = vector.multi_reduction <add>, %23, %cst_9 [1] : vector<8x84xf32> to vector<8xf32>
    %25 = vector.shape_cast %24 : vector<8xf32> to vector<8x1xf32>
    %cst_10 = arith.constant 0.0119047621 : f32
    %26 = vector.broadcast %cst_10 : f32 to vector<8x1xf32>
    %27 = arith.mulf %25, %26 : vector<8x1xf32>
    %28 = vector.broadcast %27 : vector<8x1xf32> to vector<8x84xf32>
    %29 = arith.subf %23, %28 : vector<8x84xf32>
    %30 = arith.mulf %29, %29 : vector<8x84xf32>
    %cst_11 = arith.constant dense<0.000000e+00> : vector<8xf32>
    %31 = vector.multi_reduction <add>, %30, %cst_11 [1] : vector<8x84xf32> to vector<8xf32>
    %32 = vector.shape_cast %31 : vector<8xf32> to vector<8x1xf32>
    %cst_12 = arith.constant 0.0119047621 : f32
    %33 = vector.broadcast %cst_12 : f32 to vector<8x1xf32>
    %34 = arith.mulf %32, %33 : vector<8x1xf32>
    %cst_13 = arith.constant 9.99999974E-6 : f32
    %35 = vector.broadcast %cst_13 : f32 to vector<8x1xf32>
    %36 = arith.addf %34, %35 : vector<8x1xf32>
    %37 = math.rsqrt %36 : vector<8x1xf32>
    %38 = arith.mulf %10, %37 : vector<8x1xf32>
    %39 = vector.broadcast %38 : vector<8x1xf32> to vector<8x84xf32>
    %40 = arith.mulf %29, %39 : vector<8x84xf32>
    %41 = vector.broadcast %11 : vector<8x1xf32> to vector<8x84xf32>
    %42 = arith.addf %40, %41 : vector<8x84xf32>
    %cst_14 = arith.constant 0.000000e+00 : f32
    %43 = vector.broadcast %cst_14 : f32 to vector<8x84xf32>
    %44 = arith.maximumf %42, %43 : vector<8x84xf32>
    %c0_15 = arith.constant 0 : index
    %c0_16 = arith.constant 0 : index
    %45 = vector.load %arg5[%c0_15, %c0_16] : memref<84x252xf32, #tpu.memory_space<vmem>>, vector<84x252xf32>
    %cst_17 = arith.constant dense<0.000000e+00> : vector<8x252xf32>
    %46 = tpu.matmul %44, %45, %cst_17 {dimension_numbers = #tpu.dot_dimension_numbers<[1], [0], [0], [1], [0, 0, 1, 1], [], []>} : vector<8x84xf32>, vector<84x252xf32>, vector<8x252xf32> -> vector<8x252xf32>
    %47 = vector.extract_strided_slice %46 {offsets = [0, 0], sizes = [8, 84], strides = [1, 1]} : vector<8x252xf32> to vector<8x84xf32>
    %48 = vector.extract_strided_slice %46 {offsets = [0, 84], sizes = [8, 84], strides = [1, 1]} : vector<8x252xf32> to vector<8x84xf32>
    %49 = vector.extract_strided_slice %46 {offsets = [0, 168], sizes = [8, 84], strides = [1, 1]} : vector<8x252xf32> to vector<8x84xf32>
    %50 = tpu.concatenate %44, %47, %48, %49 in 0 : vector<8x84xf32>, vector<8x84xf32>, vector<8x84xf32>, vector<8x84xf32> -> vector<32x84xf32>
    %cst_18 = arith.constant dense<0.000000e+00> : vector<8x84xf32>
    %51 = tpu.matmul %6, %50, %cst_18 {dimension_numbers = #tpu.dot_dimension_numbers<[1], [0], [0], [1], [0, 0, 1, 1], [], []>} : vector<8x32xf32>, vector<32x84xf32>, vector<8x84xf32> -> vector<8x84xf32>
    %52 = vector.broadcast %12 : vector<8x1xf32> to vector<8x84xf32>
    %53 = arith.addf %51, %52 : vector<8x84xf32>
    %cst_19 = arith.constant dense<0.000000e+00> : vector<8xf32>
    %54 = vector.multi_reduction <add>, %53, %cst_19 [1] : vector<8x84xf32> to vector<8xf32>
    %55 = vector.shape_cast %54 : vector<8xf32> to vector<8x1xf32>
    %cst_20 = arith.constant 0.0119047621 : f32
    %56 = vector.broadcast %cst_20 : f32 to vector<8x1xf32>
    %57 = arith.mulf %55, %56 : vector<8x1xf32>
    %58 = vector.broadcast %57 : vector<8x1xf32> to vector<8x84xf32>
    %59 = arith.subf %53, %58 : vector<8x84xf32>
    %60 = arith.mulf %59, %59 : vector<8x84xf32>
    %cst_21 = arith.constant dense<0.000000e+00> : vector<8xf32>
    %61 = vector.multi_reduction <add>, %60, %cst_21 [1] : vector<8x84xf32> to vector<8xf32>
    %62 = vector.shape_cast %61 : vector<8xf32> to vector<8x1xf32>
    %cst_22 = arith.constant 0.0119047621 : f32
    %63 = vector.broadcast %cst_22 : f32 to vector<8x1xf32>
    %64 = arith.mulf %62, %63 : vector<8x1xf32>
    %cst_23 = arith.constant 9.99999974E-6 : f32
    %65 = vector.broadcast %cst_23 : f32 to vector<8x1xf32>
    %66 = arith.addf %64, %65 : vector<8x1xf32>
    %67 = math.rsqrt %66 : vector<8x1xf32>
    %68 = arith.mulf %13, %67 : vector<8x1xf32>
    %69 = vector.broadcast %68 : vector<8x1xf32> to vector<8x84xf32>
    %70 = arith.mulf %59, %69 : vector<8x84xf32>
    %71 = vector.broadcast %14 : vector<8x1xf32> to vector<8x84xf32>
    %72 = arith.addf %70, %71 : vector<8x84xf32>
    %cst_24 = arith.constant 0.000000e+00 : f32
    %73 = vector.broadcast %cst_24 : f32 to vector<8x84xf32>
    %74 = arith.maximumf %72, %73 : vector<8x84xf32>
    %cst_25 = arith.constant dense<0.000000e+00> : vector<16x84xf32>
    %75 = tpu.matmul %7, %74, %cst_25 {dimension_numbers = #tpu.dot_dimension_numbers<[1], [0], [0], [1], [0, 0, 1, 1], [], []>} : vector<16x8xf32>, vector<8x84xf32>, vector<16x84xf32> -> vector<16x84xf32>
    %76 = vector.broadcast %15 : vector<16x1xf32> to vector<16x84xf32>
    %77 = arith.addf %75, %76 : vector<16x84xf32>
    %cst_26 = arith.constant dense<0.000000e+00> : vector<16xf32>
    %78 = vector.multi_reduction <add>, %77, %cst_26 [1] : vector<16x84xf32> to vector<16xf32>
    %79 = vector.shape_cast %78 : vector<16xf32> to vector<16x1xf32>
    %cst_27 = arith.constant 0.0119047621 : f32
    %80 = vector.broadcast %cst_27 : f32 to vector<16x1xf32>
    %81 = arith.mulf %79, %80 : vector<16x1xf32>
    %82 = vector.broadcast %81 : vector<16x1xf32> to vector<16x84xf32>
    %83 = arith.subf %77, %82 : vector<16x84xf32>
    %84 = arith.mulf %83, %83 : vector<16x84xf32>
    %cst_28 = arith.constant dense<0.000000e+00> : vector<16xf32>
    %85 = vector.multi_reduction <add>, %84, %cst_28 [1] : vector<16x84xf32> to vector<16xf32>
    %86 = vector.shape_cast %85 : vector<16xf32> to vector<16x1xf32>
    %cst_29 = arith.constant 0.0119047621 : f32
    %87 = vector.broadcast %cst_29 : f32 to vector<16x1xf32>
    %88 = arith.mulf %86, %87 : vector<16x1xf32>
    %cst_30 = arith.constant 9.99999974E-6 : f32
    %89 = vector.broadcast %cst_30 : f32 to vector<16x1xf32>
    %90 = arith.addf %88, %89 : vector<16x1xf32>
    %91 = math.rsqrt %90 : vector<16x1xf32>
    %92 = arith.mulf %16, %91 : vector<16x1xf32>
    %93 = vector.broadcast %92 : vector<16x1xf32> to vector<16x84xf32>
    %94 = arith.mulf %83, %93 : vector<16x84xf32>
    %95 = vector.broadcast %17 : vector<16x1xf32> to vector<16x84xf32>
    %96 = arith.addf %94, %95 : vector<16x84xf32>
    %cst_31 = arith.constant dense<0.000000e+00> : vector<16x84xf32>
    %97 = tpu.matmul %8, %0, %cst_31 {dimension_numbers = #tpu.dot_dimension_numbers<[1], [0], [0], [1], [0, 0, 1, 1], [], []>} : vector<16x8xf32>, vector<8x84xf32>, vector<16x84xf32> -> vector<16x84xf32>
    %98 = vector.broadcast %18 : vector<16x1xf32> to vector<16x84xf32>
    %99 = arith.addf %97, %98 : vector<16x84xf32>
    %cst_32 = arith.constant dense<0.000000e+00> : vector<16xf32>
    %100 = vector.multi_reduction <add>, %99, %cst_32 [1] : vector<16x84xf32> to vector<16xf32>
    %101 = vector.shape_cast %100 : vector<16xf32> to vector<16x1xf32>
    %cst_33 = arith.constant 0.0119047621 : f32
    %102 = vector.broadcast %cst_33 : f32 to vector<16x1xf32>
    %103 = arith.mulf %101, %102 : vector<16x1xf32>
    %104 = vector.broadcast %103 : vector<16x1xf32> to vector<16x84xf32>
    %105 = arith.subf %99, %104 : vector<16x84xf32>
    %106 = arith.mulf %105, %105 : vector<16x84xf32>
    %cst_34 = arith.constant dense<0.000000e+00> : vector<16xf32>
    %107 = vector.multi_reduction <add>, %106, %cst_34 [1] : vector<16x84xf32> to vector<16xf32>
    %108 = vector.shape_cast %107 : vector<16xf32> to vector<16x1xf32>
    %cst_35 = arith.constant 0.0119047621 : f32
    %109 = vector.broadcast %cst_35 : f32 to vector<16x1xf32>
    %110 = arith.mulf %108, %109 : vector<16x1xf32>
    %cst_36 = arith.constant 9.99999974E-6 : f32
    %111 = vector.broadcast %cst_36 : f32 to vector<16x1xf32>
    %112 = arith.addf %110, %111 : vector<16x1xf32>
    %113 = math.rsqrt %112 : vector<16x1xf32>
    %114 = arith.mulf %19, %113 : vector<16x1xf32>
    %115 = vector.broadcast %114 : vector<16x1xf32> to vector<16x84xf32>
    %116 = arith.mulf %105, %115 : vector<16x84xf32>
    %117 = vector.broadcast %20 : vector<16x1xf32> to vector<16x84xf32>
    %118 = arith.addf %116, %117 : vector<16x84xf32>
    %119 = arith.addf %96, %118 : vector<16x84xf32>
    %cst_37 = arith.constant 0.000000e+00 : f32
    %120 = vector.broadcast %cst_37 : f32 to vector<16x84xf32>
    %121 = arith.maximumf %119, %120 : vector<16x84xf32>
    %c0_38 = arith.constant 0 : index
    %c0_39 = arith.constant 0 : index
    %122 = vector.load %arg6[%c0_38, %c0_39] : memref<16x84xf32, #tpu.memory_space<vmem>>, vector<16x84xf32>
    tpu.vector_store %arg6[%c0_38, %c0_39], %121 {strides = array<i32>} : memref<16x84xf32, #tpu.memory_space<vmem>>, vector<16x84xf32>,
    return
  }
}

</mosaic_0001>

<llo_original>
// kernel: resblock_forward.1
$region0: #{resblock_forward.1}
  #allocation0 [shape = 'u32[]', space=smem, size = 0x4, offset = 0x4, fixed_abs, tag = 'smem constant byte address 0x4 - core index']
  #allocation1 [shape = 'u32[144,128]{1,0:T(1,128)}', space=vmem, size = 0x12000, scoped, tag = 'internal scratch']
  %s0 = inlined_call_operand.vmem [shape: f32[8,84], index: 0, kind: input, shape index: {}]
  %s1 = inlined_call_operand.vmem [shape: f32[8,40], index: 1, kind: input, shape index: {}]
  %s2 = inlined_call_operand.vmem [shape: f32[16,16], index: 2, kind: input, shape index: {}]
  %s3 = inlined_call_operand.vmem [shape: f32[8,6], index: 3, kind: input, shape index: {}]
  %s4 = inlined_call_operand.vmem [shape: f32[16,6], index: 4, kind: input, shape index: {}]
  %s5 = inlined_call_operand.vmem [shape: f32[84,252], index: 5, kind: input, shape index: {}]
  %s6 = inlined_call_operand.vmem [shape: f32[16,84], index: 6, kind: output, shape index: {}]
  %s7 = sld [smem:[#allocation0]]
  $region34: #{resblock_forward.1} parent=0
    _
  %s9 = ssub.s32 1, %s7
  %s10 = scalar_select 0, %s9, %s7
  // Predicated region
  $region2: #{resblock_forward.1} parent=0 // pred_check
    _
  $region3: #{resblock_forward.1} parent=0 // pred_check_branch
    %12 = sbr.rel (0) target = $region5
  $region4: #{resblock_forward.1} parent=0 // pred_region
    _
  $region5: #{resblock_forward.1} parent=0 // pred_fallthru
    _
  // Predicated region
  $region6: #{resblock_forward.1} parent=0 // pred_check
    _
  $region7: #{resblock_forward.1} parent=0 // pred_check_branch
    %14 = sbr.rel (0) target = $region9
  $region8: #{resblock_forward.1} parent=0 // pred_region
    _
  $region9: #{resblock_forward.1} parent=0 // pred_fallthru
    _
  // Predicated region
  $region10: #{resblock_forward.1} parent=0 // pred_check
    _
  $region11: #{resblock_forward.1} parent=0 // pred_check_branch
    %16 = sbr.rel (0) target = $region13
  $region12: #{resblock_forward.1} parent=0 // pred_region
    _
  $region13: #{resblock_forward.1} parent=0 // pred_fallthru
    _
  // Predicated region
  $region14: #{resblock_forward.1} parent=0 // pred_check
    _
  $region15: #{resblock_forward.1} parent=0 // pred_check_branch
    %18 = sbr.rel (0) target = $region17
  $region16: #{resblock_forward.1} parent=0 // pred_region
    _
  $region17: #{resblock_forward.1} parent=0 // pred_fallthru
    _
  // Predicated region
  $region18: #{resblock_forward.1} parent=0 // pred_check
    _
  $region19: #{resblock_forward.1} parent=0 // pred_check_branch
    %20 = sbr.rel (0) target = $region21
  $region20: #{resblock_forward.1} parent=0 // pred_region
    _
  $region21: #{resblock_forward.1} parent=0 // pred_fallthru
    _
  // Predicated region
  $region22: #{resblock_forward.1} parent=0 // pred_check
    _
  $region23: #{resblock_forward.1} parent=0 // pred_check_branch
    %22 = sbr.rel (0) target = $region25
  $region24: #{resblock_forward.1} parent=0 // pred_region
    _
  $region25: #{resblock_forward.1} parent=0 // pred_fallthru
    _
  %v23 = vld [vmem:[%s0] sm:$0xff]
  %v24 = vld [vmem:[%s1] sm:$0xff]
  %v25 = vld [vmem:[%s2] sm:$0xff]
  %v26 = vld [vmem:[%s2 + $0x8] sm:$0xff]
  %v27 = vld [vmem:[%s3] sm:$0xff]
  %v28 = vld [vmem:[%s4] sm:$0xff]
  %v29 = vld [vmem:[%s4 + $0x8] sm:$0xff]
  %31 = vset.pattern.permute.xlu0 0
  %32 = vperm.xlu0 %31, %v27
  %v33 = vpop.permute.xlu0 %32
  %vm35 = vcmask 64512
  %v37 = vsel %vm35, %v24, 0
  %39 = vmatprep.subr.mxu0 0.0
  %40 = vmatpush1.msra.mxu0 %v23
  %41 = vmatprep.subr.mxu0 0.0
  %42 = vmatpush1.msra.mxu0 0.0
  %43 = vmatprep.subr.mxu0 0.0
  %44 = vmatpush1.msra.mxu0 0.0
  %45 = vmatprep.subr.mxu0 0.0
  %46 = vmatpush1.msra.mxu0 0.0
  %47 = vmatprep.subr.mxu0 0.0
  %48 = vmatpush1.msra.mxu0 0.0
  %49 = vmatprep.subr.mxu0 0.0
  %50 = vmatpush1.msra.mxu0 0.0
  %51 = vmatprep.subr.mxu0 0.0
  %52 = vmatpush1.msra.mxu0 0.0
  %53 = vmatprep.subr.mxu0 0.0
  %54 = vmatpush1.msra.mxu0 0.0
  %55 = vmatprep.subr.mxu0 0.0
  %56 = vmatpush1.msra.mxu0 0.0
  %57 = vmatprep.subr.mxu0 0.0
  %58 = vmatpush1.msra.mxu0 0.0
  %59 = vmatprep.subr.mxu0 0.0
  %60 = vmatpush1.msra.mxu0 0.0
  %61 = vmatprep.subr.mxu0 0.0
  %62 = vmatpush1.msra.mxu0 0.0
  %63 = vmatprep.subr.mxu0 0.0
  %64 = vmatpush1.msra.mxu0 0.0
  %65 = vmatprep.subr.mxu0 0.0
  %66 = vmatpush1.msra.mxu0 0.0
  %67 = vmatprep.subr.mxu0 0.0
  %68 = vmatpush1.msra.mxu0 0.0
  %69 = vmatprep.subr.mxu0 0.0
  %70 = vmatpush1.msra.mxu0 0.0
  %71 = vmatprep.subr.mxu0 0.0
  %72 = vmatpush1.msra.mxu0 0.0
  %73 = vmatprep.subr.mxu0 0.0
  %74 = vmatpush1.msra.mxu0 0.0
  %75 = vmatprep.subr.mxu0 0.0
  %76 = vmatpush1.msra.mxu0 0.0
  %77 = vmatprep.subr.mxu0 0.0
  %78 = vmatpush1.msra.mxu0 0.0
  %79 = vmatprep.subr.mxu0 0.0
  %80 = vmatpush1.msra.mxu0 0.0
  %81 = vmatprep.subr.mxu0 0.0
  %82 = vmatpush1.msra.mxu0 0.0
  %83 = vmatprep.subr.mxu0 0.0
  %84 = vmatpush1.msra.mxu0 0.0
  %85 = vmatprep.subr.mxu0 0.0
  %86 = vmatpush1.msra.mxu0 0.0
  %87 = vmatprep.subr.mxu0 0.0
  %88 = vmatpush1.msra.mxu0 0.0
  %89 = vmatprep.subr.mxu0 0.0
  %90 = vmatpush1.msra.mxu0 0.0
  %91 = vmatprep.subr.mxu0 0.0
  %92 = vmatpush1.msra.mxu0 0.0
  %93 = vmatprep.subr.mxu0 0.0
  %94 = vmatpush1.msra.mxu0 0.0
  %95 = vmatprep.subr.mxu0 0.0
  %96 = vmatpush1.msra.mxu0 0.0
  %97 = vmatprep.subr.mxu0 0.0
  %98 = vmatpush1.msra.mxu0 0.0
  %99 = vmatprep.subr.mxu0 0.0
  %100 = vmatpush1.msra.mxu0 0.0
  %101 = vmatprep.subr.mxu0 0.0
  %102 = vmatpush1.msra.mxu0 0.0
  %103 = vmatprep.mubr.f32.mxu0 0.0
  %104 = vmatmul.mubr.f32.gmra.mrb[0].mxu0 %v37
  %v105 = vpop.f32.mrb[0].mxu0
  %v106 = vadd.f32 %v33, %v105
  %v107 = vpop.f32.mrb[0].mxu0
  %108 = vdwg.mxu0
  %vm109 = vcmask 687104
  %v110 = vsel %vm109, %v106, 0.0
  %111 = vadd.xlane.f32.xlu0 %v110
  %v112 = vpop.xlane.xlu0 %111
  %v113 = vmul.f32 %v112, 0.011904762
  %v114 = vsub.f32 %v106, %v113
  %v115 = vmul.f32 %v114, %v114
  %v116 = vsel %vm109, %v115, 0.0
  %117 = vadd.xlane.f32.xlu0 %v116
  %v118 = vpop.xlane.xlu0 %117
  %v119 = vmul.f32 %v118, 0.011904762
  %v120 = vadd.f32 %v119, 1e-05
  %v121 = vrsqrt.pop %v120
  %v122 = vmul.f32 %v27, %v121
  %124 = vset.pattern.permute.xlu0 1
  %125 = vperm.xlu0 %124, %v122
  %v126 = vpop.permute.xlu0 %125
  %v128 = vmul.f32 %v114, %v126
  %129 = vset.pattern.permute.xlu0 2
  %130 = vperm.xlu0 %129, %v27
  %v131 = vpop.permute.xlu0 %130
  %v133 = vadd.f32 %v128, %v131
  %v134 = vmax.f32 %v133, 0.0
  %v135 = vld [vmem:[%s5] sm:$0xff]
  %v136 = vld [vmem:[%s5 + $0x8] sm:$0xff]
  %v137 = vld [vmem:[%s5 + $0x10] sm:$0xff]
  %v138 = vld [vmem:[%s5 + $0x18] sm:$0xff]
  %v139 = vld [vmem:[%s5 + $0x20] sm:$0xff]
  %v140 = vld [vmem:[%s5 + $0x28] sm:$0xff]
  %v141 = vld [vmem:[%s5 + $0x30] sm:$0xff]
  %v142 = vld [vmem:[%s5 + $0x38] sm:$0xff]
  %v143 = vld [vmem:[%s5 + $0x40] sm:$0xff]
  %v144 = vld [vmem:[%s5 + $0x48] sm:$0xff]
  %v145 = vld [vmem:[%s5 + $0x50] sm:$0xff]
  %v146 = vld [vmem:[%s5 + $0x58] sm:$0xff]
  %v147 = vld [vmem:[%s5 + $0x60] sm:$0xff]
  %v148 = vld [vmem:[%s5 + $0x68] sm:$0xff]
  %v149 = vld [vmem:[%s5 + $0x70] sm:$0xff]
  %v150 = vld [vmem:[%s5 + $0x78] sm:$0xff]
  %v151 = vld [vmem:[%s5 + $0x80] sm:$0xff]
  %v152 = vld [vmem:[%s5 + $0x88] sm:$0xff]
  %v153 = vld [vmem:[%s5 + $0x90] sm:$0xff]
  %v154 = vld [vmem:[%s5 + $0x98] sm:$0xff]
  %v155 = vld [vmem:[%s5 + $0xa0] sm:$0xf]
  %v156 = vld [vmem:[%s5 + $0xa8] sm:$0xf]
  %v158 = vsel %vm109, %v134, 0
  %vm160 = vcmask 1043456
  %v162 = vsel %vm160, %v155, 0
  %v165 = vsel %vm160, %v156, 0
  %167 = vmatprep.subr.mxu0 %v136
  %168 = vmatpush1.msra.mxu0 %v135
  %169 = vmatprep.subr.mxu0 %v138
  %170 = vmatpush1.msra.mxu0 %v137
  %171 = vmatprep.subr.mxu0 %v140
  %172 = vmatpush1.msra.mxu0 %v139
  %173 = vmatprep.subr.mxu0 %v142
  %174 = vmatpush1.msra.mxu0 %v141
  %175 = vmatprep.subr.mxu0 %v144
  %176 = vmatpush1.msra.mxu0 %v143
  %177 = vmatprep.subr.mxu0 %v146
  %178 = vmatpush1.msra.mxu0 %v145
  %179 = vmatprep.subr.mxu0 %v148
  %180 = vmatpush1.msra.mxu0 %v147
  %181 = vmatprep.subr.mxu0 %v150
  %182 = vmatpush1.msra.mxu0 %v149
  %183 = vmatprep.subr.mxu0 %v152
  %184 = vmatpush1.msra.mxu0 %v151
  %185 = vmatprep.subr.mxu0 %v154
  %186 = vmatpush1.msra.mxu0 %v153
  %187 = vmatprep.subr.mxu0 %v165
  %188 = vmatpush1.msra.mxu0 %v162
  %189 = vmatprep.subr.mxu0 0.0
  %190 = vmatpush1.msra.mxu0 0.0
  %191 = vmatprep.subr.mxu0 0.0
  %192 = vmatpush1.msra.mxu0 0.0
  %193 = vmatprep.subr.mxu0 0.0
  %194 = vmatpush1.msra.mxu0 0.0
  %195 = vmatprep.subr.mxu0 0.0
  %196 = vmatpush1.msra.mxu0 0.0
  %197 = vmatprep.subr.mxu0 0.0
  %198 = vmatpush1.msra.mxu0 0.0
  %199 = vmatprep.subr.mxu0 0.0
  %200 = vmatpush1.msra.mxu0 0.0
  %201 = vmatprep.subr.mxu0 0.0
  %202 = vmatpush1.msra.mxu0 0.0
  %203 = vmatprep.subr.mxu0 0.0
  %204 = vmatpush1.msra.mxu0 0.0
  %205 = vmatprep.subr.mxu0 0.0
  %206 = vmatpush1.msra.mxu0 0.0
  %207 = vmatprep.subr.mxu0 0.0
  %208 = vmatpush1.msra.mxu0 0.0
  %209 = vmatprep.subr.mxu0 0.0
  %210 = vmatpush1.msra.mxu0 0.0
  %211 = vmatprep.subr.mxu0 0.0
  %212 = vmatpush1.msra.mxu0 0.0
  %213 = vmatprep.subr.mxu0 0.0
  %214 = vmatpush1.msra.mxu0 0.0
  %215 = vmatprep.subr.mxu0 0.0
  %216 = vmatpush1.msra.mxu0 0.0
  %217 = vmatprep.subr.mxu0 0.0
  %218 = vmatpush1.msra.mxu0 0.0
  %219 = vmatprep.subr.mxu0 0.0
  %220 = vmatpush1.msra.mxu0 0.0
  %221 = vmatprep.subr.mxu0 0.0
  %222 = vmatpush1.msra.mxu0 0.0
  %223 = vmatprep.subr.mxu0 0.0
  %224 = vmatpush1.msra.mxu0 0.0
  %225 = vmatprep.subr.mxu0 0.0
  %226 = vmatpush1.msra.mxu0 0.0
  %227 = vmatprep.subr.mxu0 0.0
  %228 = vmatpush1.msra.mxu0 0.0
  %229 = vmatprep.subr.mxu0 0.0
  %230 = vmatpush1.msra.mxu0 0.0
  %231 = vmatprep.mubr.f32.mxu0 0.0
  %232 = vmatmul.mubr.f32.gmra.mrb[0].mxu0 %v158
  %v233 = vpop.f32.mrb[0].mxu0
  %v234 = vadd.f32 0.0, %v233
  %v235 = vpop.f32.mrb[0].mxu0
  %v236 = vadd.f32 0.0, %v235
  %237 = vdwg.mxu0
  %240 = vrot.lane.b32.xlu0 %v234, 44
  %v241 = vpop.permute.xlu0 %240
  %242 = vrot.lane.b32.xlu0 %v236, 44
  %v243 = vpop.permute.xlu0 %242
  %vm244 = vcmask 359424
  %v245 = vsel %vm244, %v241, %v243
  %247 = vrot.lane.b32.xlu0 %v236, 88
  %v248 = vpop.permute.xlu0 %247
  %250 = vset.pattern.permute.xlu0 3
  %251 = vperm.xlu0 %250, %v27
  %v252 = vpop.permute.xlu0 %251
  %254 = vrot.lane.b32.xlu0 %v24, 120
  %v255 = vpop.permute.xlu0 %254
  %vm256 = vcmask 261120
  %v257 = vsel %vm256, %v255, 0
  %259 = vmatprep.subr.mxu0 0.0
  %260 = vmatpush1.msra.mxu0 %v134
  %261 = vmatprep.subr.mxu0 0.0
  %262 = vmatpush1.msra.mxu0 %v234
  %263 = vmatprep.subr.mxu0 0.0
  %264 = vmatpush1.msra.mxu0 %v245
  %265 = vmatprep.subr.mxu0 0.0
  %266 = vmatpush1.msra.mxu0 %v248
  %267 = vmatprep.subr.mxu0 0.0
  %268 = vmatpush1.msra.mxu0 0.0
  %269 = vmatprep.subr.mxu0 0.0
  %270 = vmatpush1.msra.mxu0 0.0
  %271 = vmatprep.subr.mxu0 0.0
  %272 = vmatpush1.msra.mxu0 0.0
  %273 = vmatprep.subr.mxu0 0.0
  %274 = vmatpush1.msra.mxu0 0.0
  %275 = vmatprep.subr.mxu0 0.0
  %276 = vmatpush1.msra.mxu0 0.0
  %277 = vmatprep.subr.mxu0 0.0
  %278 = vmatpush1.msra.mxu0 0.0
  %279 = vmatprep.subr.mxu0 0.0
  %280 = vmatpush1.msra.mxu0 0.0
  %281 = vmatprep.subr.mxu0 0.0
  %282 = vmatpush1.msra.mxu0 0.0
  %283 = vmatprep.subr.mxu0 0.0
  %284 = vmatpush1.msra.mxu0 0.0
  %285 = vmatprep.subr.mxu0 0.0
  %286 = vmatpush1.msra.mxu0 0.0
  %287 = vmatprep.subr.mxu0 0.0
  %288 = vmatpush1.msra.mxu0 0.0
  %289 = vmatprep.subr.mxu0 0.0
  %290 = vmatpush1.msra.mxu0 0.0
  %291 = vmatprep.subr.mxu0 0.0
  %292 = vmatpush1.msra.mxu0 0.0
  %293 = vmatprep.subr.mxu0 0.0
  %294 = vmatpush1.msra.mxu0 0.0
  %295 = vmatprep.subr.mxu0 0.0
  %296 = vmatpush1.msra.mxu0 0.0
  %297 = vmatprep.subr.mxu0 0.0
  %298 = vmatpush1.msra.mxu0 0.0
  %299 = vmatprep.subr.mxu0 0.0
  %300 = vmatpush1.msra.mxu0 0.0
  %301 = vmatprep.subr.mxu0 0.0
  %302 = vmatpush1.msra.mxu0 0.0
  %303 = vmatprep.subr.mxu0 0.0
  %304 = vmatpush1.msra.mxu0 0.0
  %305 = vmatprep.subr.mxu0 0.0
  %306 = vmatpush1.msra.mxu0 0.0
  %307 = vmatprep.subr.mxu0 0.0
  %308 = vmatpush1.msra.mxu0 0.0
  %309 = vmatprep.subr.mxu0 0.0
  %310 = vmatpush1.msra.mxu0 0.0
  %311 = vmatprep.subr.mxu0 0.0
  %312 = vmatpush1.msra.mxu0 0.0
  %313 = vmatprep.subr.mxu0 0.0
  %314 = vmatpush1.msra.mxu0 0.0
  %315 = vmatprep.subr.mxu0 0.0
  %316 = vmatpush1.msra.mxu0 0.0
  %317 = vmatprep.subr.mxu0 0.0
  %318 = vmatpush1.msra.mxu0 0.0
  %319 = vmatprep.subr.mxu0 0.0
  %320 = vmatpush1.msra.mxu0 0.0
  %321 = vmatprep.subr.mxu0 0.0
  %322 = vmatpush1.msra.mxu0 0.0
  %323 = vmatprep.mubr.f32.mxu0 0.0
  %324 = vmatmul.mubr.f32.gmra.mrb[0].mxu0 %v257
  %v325 = vpop.f32.mrb[0].mxu0
  %v326 = vadd.f32 %v252, %v325
  %v327 = vpop.f32.mrb[0].mxu0
  %328 = vdwg.mxu0
  %v329 = vsel %vm109, %v326, 0.0
  %330 = vadd.xlane.f32.xlu0 %v329
  %v331 = vpop.xlane.xlu0 %330
  %v332 = vmul.f32 %v331, 0.011904762
  %v333 = vsub.f32 %v326, %v332
  %v334 = vmul.f32 %v333, %v333
  %v335 = vsel %vm109, %v334, 0.0
  %336 = vadd.xlane.f32.xlu0 %v335
  %v337 = vpop.xlane.xlu0 %336
  %v338 = vmul.f32 %v337, 0.011904762
  %v339 = vadd.f32 %v338, 1e-05
  %v340 = vrsqrt.pop %v339
  %v341 = vmul.f32 %v27, %v340
  %343 = vset.pattern.permute.xlu0 4
  %344 = vperm.xlu0 %343, %v341
  %v345 = vpop.permute.xlu0 %344
  %v347 = vmul.f32 %v333, %v345
  %348 = vset.pattern.permute.xlu0 5
  %349 = vperm.xlu0 %348, %v27
  %v350 = vpop.permute.xlu0 %349
  %v352 = vadd.f32 %v347, %v350
  %v353 = vmax.f32 %v352, 0.0
  %355 = vset.pattern.permute.xlu0 0
  %356 = vperm.xlu0 %355, %v28
  %v357 = vpop.permute.xlu0 %356
  %360 = vset.pattern.permute.xlu0 0
  %361 = vperm.xlu0 %360, %v29
  %v362 = vpop.permute.xlu0 %361
  %v365 = vsel %vm35, %v25, 0
  %v368 = vsel %vm35, %v26, 0
  %370 = vmatprep.subr.mxu0 0.0
  %371 = vmatpush1.msra.mxu0 %v353
  %372 = vmatprep.subr.mxu0 0.0
  %373 = vmatpush1.msra.mxu0 0.0
  %374 = vmatprep.subr.mxu0 0.0
  %375 = vmatpush1.msra.mxu0 0.0
  %376 = vmatprep.subr.mxu0 0.0
  %377 = vmatpush1.msra.mxu0 0.0
  %378 = vmatprep.subr.mxu0 0.0
  %379 = vmatpush1.msra.mxu0 0.0
  %380 = vmatprep.subr.mxu0 0.0
  %381 = vmatpush1.msra.mxu0 0.0
  %382 = vmatprep.subr.mxu0 0.0
  %383 = vmatpush1.msra.mxu0 0.0
  %384 = vmatprep.subr.mxu0 0.0
  %385 = vmatpush1.msra.mxu0 0.0
  %386 = vmatprep.subr.mxu0 0.0
  %387 = vmatpush1.msra.mxu0 0.0
  %388 = vmatprep.subr.mxu0 0.0
  %389 = vmatpush1.msra.mxu0 0.0
  %390 = vmatprep.subr.mxu0 0.0
  %391 = vmatpush1.msra.mxu0 0.0
  %392 = vmatprep.subr.mxu0 0.0
  %393 = vmatpush1.msra.mxu0 0.0
  %394 = vmatprep.subr.mxu0 0.0
  %395 = vmatpush1.msra.mxu0 0.0
  %396 = vmatprep.subr.mxu0 0.0
  %397 = vmatpush1.msra.mxu0 0.0
  %398 = vmatprep.subr.mxu0 0.0
  %399 = vmatpush1.msra.mxu0 0.0
  %400 = vmatprep.subr.mxu0 0.0
  %401 = vmatpush1.msra.mxu0 0.0
  %402 = vmatprep.subr.mxu0 0.0
  %403 = vmatpush1.msra.mxu0 0.0
  %404 = vmatprep.subr.mxu0 0.0
  %405 = vmatpush1.msra.mxu0 0.0
  %406 = vmatprep.subr.mxu0 0.0
  %407 = vmatpush1.msra.mxu0 0.0
  %408 = vmatprep.subr.mxu0 0.0
  %409 = vmatpush1.msra.mxu0 0.0
  %410 = vmatprep.subr.mxu0 0.0
  %411 = vmatpush1.msra.mxu0 0.0
  %412 = vmatprep.subr.mxu0 0.0
  %413 = vmatpush1.msra.mxu0 0.0
  %414 = vmatprep.subr.mxu0 0.0
  %415 = vmatpush1.msra.mxu0 0.0
  %416 = vmatprep.subr.mxu0 0.0
  %417 = vmatpush1.msra.mxu0 0.0
  %418 = vmatprep.subr.mxu0 0.0
  %419 = vmatpush1.msra.mxu0 0.0
  %420 = vmatprep.subr.mxu0 0.0
  %421 = vmatpush1.msra.mxu0 0.0
  %422 = vmatprep.subr.mxu0 0.0
  %423 = vmatpush1.msra.mxu0 0.0
  %424 = vmatprep.subr.mxu0 0.0
  %425 = vmatpush1.msra.mxu0 0.0
  %426 = vmatprep.subr.mxu0 0.0
  %427 = vmatpush1.msra.mxu0 0.0
  %428 = vmatprep.subr.mxu0 0.0
  %429 = vmatpush1.msra.mxu0 0.0
  %430 = vmatprep.subr.mxu0 0.0
  %431 = vmatpush1.msra.mxu0 0.0
  %432 = vmatprep.subr.mxu0 0.0
  %433 = vmatpush1.msra.mxu0 0.0
  %434 = vmatprep.mubr.f32.mxu0 0.0
  %435 = vmatmul.mubr.f32.gmra.mrb[0].mxu0 %v365
  %v436 = vpop.f32.mrb[0].mxu0
  %v437 = vadd.f32 %v357, %v436
  %v438 = vpop.f32.mrb[0].mxu0
  %439 = vmatprep.mubr.f32.mxu0 0.0
  %440 = vmatmul.mubr.f32.gmra.mrb[0].mxu0 %v368
  %v441 = vpop.f32.mrb[0].mxu0
  %v442 = vadd.f32 %v362, %v441
  %v443 = vpop.f32.mrb[0].mxu0
  %444 = vdwg.mxu0
  %v445 = vsel %vm109, %v437, 0.0
  %446 = vadd.xlane.f32.xlu0 %v445
  %v447 = vpop.xlane.xlu0 %446
  %v448 = vsel %vm109, %v442, 0.0
  %449 = vadd.xlane.f32.xlu0 %v448
  %v450 = vpop.xlane.xlu0 %449
  %v451 = vmul.f32 %v447, 0.011904762
  %v452 = vmul.f32 %v450, 0.011904762
  %v453 = vsub.f32 %v437, %v451
  %v454 = vsub.f32 %v442, %v452
  %v455 = vmul.f32 %v453, %v453
  %v456 = vmul.f32 %v454, %v454
  %v457 = vsel %vm109, %v455, 0.0
  %458 = vadd.xlane.f32.xlu0 %v457
  %v459 = vpop.xlane.xlu0 %458
  %v460 = vsel %vm109, %v456, 0.0
  %461 = vadd.xlane.f32.xlu0 %v460
  %v462 = vpop.xlane.xlu0 %461
  %v463 = vmul.f32 %v459, 0.011904762
  %v464 = vmul.f32 %v462, 0.011904762
  %v465 = vadd.f32 %v463, 1e-05
  %v466 = vadd.f32 %v464, 1e-05
  %v467 = vrsqrt.pop %v465
  %v468 = vrsqrt.pop %v466
  %v469 = vmul.f32 %v28, %v467
  %v470 = vmul.f32 %v29, %v468
  %472 = vset.pattern.permute.xlu0 1
  %473 = vperm.xlu0 %472, %v469
  %v474 = vpop.permute.xlu0 %473
  %477 = vset.pattern.permute.xlu0 1
  %478 = vperm.xlu0 %477, %v470
  %v479 = vpop.permute.xlu0 %478
  %v481 = vmul.f32 %v453, %v474
  %v482 = vmul.f32 %v454, %v479
  %483 = vset.pattern.permute.xlu0 2
  %484 = vperm.xlu0 %483, %v28
  %v485 = vpop.permute.xlu0 %484
  %487 = vset.pattern.permute.xlu0 2
  %488 = vperm.xlu0 %487, %v29
  %v489 = vpop.permute.xlu0 %488
  %v491 = vadd.f32 %v481, %v485
  %v492 = vadd.f32 %v482, %v489
  %493 = vset.pattern.permute.xlu0 3
  %494 = vperm.xlu0 %493, %v28
  %v495 = vpop.permute.xlu0 %494
  %497 = vset.pattern.permute.xlu0 3
  %498 = vperm.xlu0 %497, %v29
  %v499 = vpop.permute.xlu0 %498
  %501 = vrot.lane.b32.xlu0 %v25, 120
  %v502 = vpop.permute.xlu0 %501
  %503 = vrot.lane.b32.xlu0 %v26, 120
  %v504 = vpop.permute.xlu0 %503
  %v505 = vsel %vm35, %v502, 0
  %v507 = vsel %vm35, %v504, 0
  %509 = vmatprep.subr.mxu0 0.0
  %510 = vmatpush1.msra.mxu0 %v23
  %511 = vmatprep.subr.mxu0 0.0
  %512 = vmatpush1.msra.mxu0 0.0
  %513 = vmatprep.subr.mxu0 0.0
  %514 = vmatpush1.msra.mxu0 0.0
  %515 = vmatprep.subr.mxu0 0.0
  %516 = vmatpush1.msra.mxu0 0.0
  %517 = vmatprep.subr.mxu0 0.0
  %518 = vmatpush1.msra.mxu0 0.0
  %519 = vmatprep.subr.mxu0 0.0
  %520 = vmatpush1.msra.mxu0 0.0
  %521 = vmatprep.subr.mxu0 0.0
  %522 = vmatpush1.msra.mxu0 0.0
  %523 = vmatprep.subr.mxu0 0.0
  %524 = vmatpush1.msra.mxu0 0.0
  %525 = vmatprep.subr.mxu0 0.0
  %526 = vmatpush1.msra.mxu0 0.0
  %527 = vmatprep.subr.mxu0 0.0
  %528 = vmatpush1.msra.mxu0 0.0
  %529 = vmatprep.subr.mxu0 0.0
  %530 = vmatpush1.msra.mxu0 0.0
  %531 = vmatprep.subr.mxu0 0.0
  %532 = vmatpush1.msra.mxu0 0.0
  %533 = vmatprep.subr.mxu0 0.0
  %534 = vmatpush1.msra.mxu0 0.0
  %535 = vmatprep.subr.mxu0 0.0
  %536 = vmatpush1.msra.mxu0 0.0
  %537 = vmatprep.subr.mxu0 0.0
  %538 = vmatpush1.msra.mxu0 0.0
  %539 = vmatprep.subr.mxu0 0.0
  %540 = vmatpush1.msra.mxu0 0.0
  %541 = vmatprep.subr.mxu0 0.0
  %542 = vmatpush1.msra.mxu0 0.0
  %543 = vmatprep.subr.mxu0 0.0
  %544 = vmatpush1.msra.mxu0 0.0
  %545 = vmatprep.subr.mxu0 0.0
  %546 = vmatpush1.msra.mxu0 0.0
  %547 = vmatprep.subr.mxu0 0.0
  %548 = vmatpush1.msra.mxu0 0.0
  %549 = vmatprep.subr.mxu0 0.0
  %550 = vmatpush1.msra.mxu0 0.0
  %551 = vmatprep.subr.mxu0 0.0
  %552 = vmatpush1.msra.mxu0 0.0
  %553 = vmatprep.subr.mxu0 0.0
  %554 = vmatpush1.msra.mxu0 0.0
  %555 = vmatprep.subr.mxu0 0.0
  %556 = vmatpush1.msra.mxu0 0.0
  %557 = vmatprep.subr.mxu0 0.0
  %558 = vmatpush1.msra.mxu0 0.0
  %559 = vmatprep.subr.mxu0 0.0
  %560 = vmatpush1.msra.mxu0 0.0
  %561 = vmatprep.subr.mxu0 0.0
  %562 = vmatpush1.msra.mxu0 0.0
  %563 = vmatprep.subr.mxu0 0.0
  %564 = vmatpush1.msra.mxu0 0.0
  %565 = vmatprep.subr.mxu0 0.0
  %566 = vmatpush1.msra.mxu0 0.0
  %567 = vmatprep.subr.mxu0 0.0
  %568 = vmatpush1.msra.mxu0 0.0
  %569 = vmatprep.subr.mxu0 0.0
  %570 = vmatpush1.msra.mxu0 0.0
  %571 = vmatprep.subr.mxu0 0.0
  %572 = vmatpush1.msra.mxu0 0.0
  %573 = vmatprep.mubr.f32.mxu0 0.0
  %574 = vmatmul.mubr.f32.gmra.mrb[0].mxu0 %v505
  %v575 = vpop.f32.mrb[0].mxu0
  %v576 = vadd.f32 %v495, %v575
  %v577 = vpop.f32.mrb[0].mxu0
  %578 = vmatprep.mubr.f32.mxu0 0.0
  %579 = vmatmul.mubr.f32.gmra.mrb[0].mxu0 %v507
  %v580 = vpop.f32.mrb[0].mxu0
  %v581 = vadd.f32 %v499, %v580
  %v582 = vpop.f32.mrb[0].mxu0
  %583 = vdwg.mxu0
  %v584 = vsel %vm109, %v576, 0.0
  %585 = vadd.xlane.f32.xlu0 %v584
  %v586 = vpop.xlane.xlu0 %585
  %v587 = vsel %vm109, %v581, 0.0
  %588 = vadd.xlane.f32.xlu0 %v587
  %v589 = vpop.xlane.xlu0 %588
  %v590 = vmul.f32 %v586, 0.011904762
  %v591 = vmul.f32 %v589, 0.011904762
  %v592 = vsub.f32 %v576, %v590
  %v593 = vsub.f32 %v581, %v591
  %v594 = vmul.f32 %v592, %v592
  %v595 = vmul.f32 %v593, %v593
  %v596 = vsel %vm109, %v594, 0.0
  %597 = vadd.xlane.f32.xlu0 %v596
  %v598 = vpop.xlane.xlu0 %597
  %v599 = vsel %vm109, %v595, 0.0
  %600 = vadd.xlane.f32.xlu0 %v599
  %v601 = vpop.xlane.xlu0 %600
  %v602 = vmul.f32 %v598, 0.011904762
  %v603 = vmul.f32 %v601, 0.011904762
  %v604 = vadd.f32 %v602, 1e-05
  %v605 = vadd.f32 %v603, 1e-05
  %v606 = vrsqrt.pop %v604
  %v607 = vrsqrt.pop %v605
  %v608 = vmul.f32 %v28, %v606
  %v609 = vmul.f32 %v29, %v607
  %611 = vset.pattern.permute.xlu0 4
  %612 = vperm.xlu0 %611, %v608
  %v613 = vpop.permute.xlu0 %612
  %616 = vset.pattern.permute.xlu0 4
  %617 = vperm.xlu0 %616, %v609
  %v618 = vpop.permute.xlu0 %617
  %v620 = vmul.f32 %v592, %v613
  %v621 = vmul.f32 %v593, %v618
  %622 = vset.pattern.permute.xlu0 5
  %623 = vperm.xlu0 %622, %v28
  %v624 = vpop.permute.xlu0 %623
  %626 = vset.pattern.permute.xlu0 5
  %627 = vperm.xlu0 %626, %v29
  %v628 = vpop.permute.xlu0 %627
  %v630 = vadd.f32 %v620, %v624
  %v631 = vadd.f32 %v621, %v628
  %v632 = vadd.f32 %v491, %v630
  %v633 = vadd.f32 %v492, %v631
  %v634 = vmax.f32 %v632, 0.0
  %v635 = vmax.f32 %v633, 0.0
  %636 = vst.msk [vmem:[%s6] sm:$0xff] %vm109, %v634
  %637 = vst.msk [vmem:[%s6 + $0x8] sm:$0xff] %vm109, %v635
  // Predicated region
  $region26: #{resblock_forward.1} parent=0 // pred_check
    _
  $region27: #{resblock_forward.1} parent=0 // pred_check_branch
    %639 = sbr.rel (0) target = $region29
  $region28: #{resblock_forward.1} parent=0 // pred_region
    _
  $region29: #{resblock_forward.1} parent=0 // pred_fallthru
    _
  // Predicated region
  $region30: #{resblock_forward.1} parent=0 // pred_check
    _
  $region31: #{resblock_forward.1} parent=0 // pred_check_branch
    %641 = sbr.rel (0) target = $region33
  $region32: #{resblock_forward.1} parent=0 // pred_region
    _
  $region33: #{resblock_forward.1} parent=0 // pred_fallthru
    _

</llo_original>
